<compile_context>
chip_gen: v6e
topology: v6e:2x2x1
jax: 0.10.0
libtpu: 0.0.40
codegen_flags: <defaults>
</compile_context>

<pallas_src>
import jax
import jax.numpy as jnp
from jax import lax
from jax.experimental import pallas as pl
from jax.experimental.pallas import tpu as pltpu

INPUT_SIZE = 100
HIDDEN_SIZE = 100
FACTORS = 5

IN_PAD = 128      # input dim padded to one lane group
HID_PAD = 128     # hidden dim padded to one lane group
TAIL_ROWS = 8     # 1 linear row + 5 factor rows + 2 zero rows (one sublane group)


def mymodel_kernel(xT_ref, w1T_ref, b1_ref, wtop_ref, wbot_ref, b2_ref, o_ref):
    # xT: (IN_PAD, TB) bf16  — batch on the lane axis.
    xT = xT_ref[...]

    # Linear(100 -> 100), transposed: hT = W1^T @ x^T + b1 (f32 accumulation).
    hT = jnp.dot(w1T_ref[...], xT, preferred_element_type=jnp.float32)
    hT = hT + b1_ref[...]                                   # (HID_PAD, TB) f32

    # Dropout(0.5) in eval mode: identity.

    h_b = hT.astype(jnp.bfloat16)
    hh_b = h_b * h_b

    # Fused FM tail (two small-M dots sharing one (8, TB) result):
    #   row 0  = h @ w2 - 0.5 * (h*h) @ rowsum(V*V)
    #   row 1..5 = t_k = h @ V[:, k]        (rows 6,7 are zero padding)
    tail = (jnp.dot(wtop_ref[...], h_b, preferred_element_type=jnp.float32)
            + jnp.dot(wbot_ref[...], hh_b, preferred_element_type=jnp.float32))

    # out_j = tail[0, j] + 0.5 * sum_k tail[k, j]^2 + b2   (lane-dense row)
    ridx = lax.broadcasted_iota(jnp.int32, tail.shape, 0)
    u = jnp.where(ridx == 0, tail, 0.5 * tail * tail)
    res = jnp.sum(u, axis=0, keepdims=True) + b2_ref[0, 0]  # (1, TB)

    o_ref[0] = res.astype(o_ref.dtype)


def _round_up(x, m):
    return ((x + m - 1) // m) * m


def _choose_tile(b):
    # Batch maps to the lane axis -> tile must be a multiple of 128.
    b128 = _round_up(max(b, 1), 128)
    # Aim for >=4 grid steps (>=2 per TensorCore on dual-TC v7x) once the
    # batch is large enough; cap the tile to bound per-step VMEM.
    tb = _round_up(-(-b128 // 4), 128)
    return max(128, min(2048, tb))


def mymodel_forward(x, params):
    """x: (B, INPUT_SIZE) f32. Returns (B, 1) f32."""
    w1, b1, w2, b2, v = params
    B = x.shape[0]

    # ---- wrapper-side weight prep (done once, outside the grid loop) ----
    # Transposed + zero-padded linear weights.
    w1T = jnp.zeros((HID_PAD, IN_PAD), jnp.float32)
    w1T = w1T.at[:HIDDEN_SIZE, :INPUT_SIZE].set(w1.T)
    b1c = jnp.zeros((HID_PAD, 1), jnp.float32)
    b1c = b1c.at[:HIDDEN_SIZE, 0].set(b1.reshape(-1))

    # FM tail weights: v2sum simplification + linear/factor stacking.
    v2sum = jnp.sum(v * v, axis=1)                           # (HIDDEN,)
    wtop = jnp.zeros((TAIL_ROWS, HID_PAD), jnp.float32)
    wtop = wtop.at[0, :HIDDEN_SIZE].set(w2[:, 0])
    wtop = wtop.at[1:1 + FACTORS, :HIDDEN_SIZE].set(v.T)
    wbot = jnp.zeros((TAIL_ROWS, HID_PAD), jnp.float32)
    wbot = wbot.at[0, :HIDDEN_SIZE].set(-0.5 * v2sum)

    w1T_b = w1T.astype(jnp.bfloat16)
    wtop_b = wtop.astype(jnp.bfloat16)
    wbot_b = wbot.astype(jnp.bfloat16)

    # ---- input prep: pad + transpose to (IN_PAD, B_pad), bf16 ----
    TB = _choose_tile(B)
    B_pad = pl.cdiv(B, TB) * TB
    n_tiles = B_pad // TB
    xT = jnp.zeros((IN_PAD, B_pad), jnp.bfloat16)
    xT = xT.at[:INPUT_SIZE, :B].set(x.T.astype(jnp.bfloat16))

    const = lambda shape: pl.BlockSpec(shape, lambda i: (0,) * len(shape))

    out = pl.pallas_call(
        mymodel_kernel,
        out_shape=jax.ShapeDtypeStruct((n_tiles, 1, TB), jnp.float32),
        grid=(n_tiles,),
        in_specs=[
            pl.BlockSpec((IN_PAD, TB), lambda i: (0, i)),        # x^T tile
            const(w1T_b.shape),                                  # W1^T, resident
            const(b1c.shape),                                    # b1 column, resident
            const(wtop_b.shape),                                 # [w2 | V]^T, resident
            const(wbot_b.shape),                                 # -0.5*rowsum(V*V), resident
            pl.BlockSpec(memory_space=pltpu.MemorySpace.SMEM),   # b2 scalar
        ],
        out_specs=pl.BlockSpec((1, 1, TB), lambda i: (i, 0, 0)),
        compiler_params=pltpu.CompilerParams(
            dimension_semantics=("parallel",),
        ),
    )(xT, w1T_b, b1c, wtop_b, wbot_b, b2)

    # (n_tiles, 1, TB) -> (B_pad, 1), drop padded batch rows.
    return out.reshape(B_pad, 1)[:B]


def init_params(key):
    k1, k2, k3, k4, k5 = jax.random.split(key, 5)
    # PyTorch-style uniform(-1/sqrt(fan_in), 1/sqrt(fan_in)) init, deterministic.
    s1 = 1.0 / jnp.sqrt(INPUT_SIZE)
    w1 = jax.random.uniform(k1, (INPUT_SIZE, HIDDEN_SIZE), jnp.float32, -s1, s1)
    b1 = jax.random.uniform(k2, (1, HIDDEN_SIZE), jnp.float32, -s1, s1)
    s2 = 1.0 / jnp.sqrt(HIDDEN_SIZE)
    w2 = jax.random.uniform(k3, (HIDDEN_SIZE, 1), jnp.float32, -s2, s2)
    b2 = jax.random.uniform(k4, (1, 1), jnp.float32, -s2, s2)
    v = 0.01 * jax.random.normal(k5, (HIDDEN_SIZE, FACTORS), jnp.float32)
    return w1, b1, w2, b2, v


def reference_forward(x, params):
    """Pure-JAX f32 reference for correctness check."""
    w1, b1, w2, b2, v = params
    h = x @ w1 + b1
    lin = h @ w2 + b2
    t = h @ v
    t2 = (h * h) @ (v * v)
    return lin + 0.5 * jnp.sum(t * t - t2, axis=-1, keepdims=True)


if __name__ == "__main__":
    key = jax.random.PRNGKey(0)
    kx, kp, kx2 = jax.random.split(key, 3)
    params = init_params(kp)
    fwd = jax.jit(mymodel_forward)

    # bf16 MXU operands (f32 accumulation) -> tolerance vs. the f32 reference
    # is loosened accordingly.
    ATOL = 3e-2
    RTOL = 3e-2

    # Small batch (single tile).
    B = 16
    x = jax.random.normal(kx, (B, INPUT_SIZE), jnp.float32)
    out = jax.block_until_ready(fwd(x, params))
    ref = reference_forward(x, params)
    assert out.shape == (B, 1), out.shape
    assert jnp.allclose(out, ref, atol=ATOL, rtol=RTOL), float(
        jnp.max(jnp.abs(out - ref)))

    # Larger, non-tile-aligned batch: exercises the multi-tile grid + padding path.
    B2 = 2000
    x2 = jax.random.normal(kx2, (B2, INPUT_SIZE), jnp.float32)
    out2 = jax.block_until_ready(fwd(x2, params))
    ref2 = reference_forward(x2, params)
    assert out2.shape == (B2, 1), out2.shape
    assert jnp.allclose(out2, ref2, atol=ATOL, rtol=RTOL), float(
        jnp.max(jnp.abs(out2 - ref2)))

    print("KERNEL_OK")
</pallas_src>

<mosaic_0001>
module attributes {stable_mosaic.version = 11 : i64} {
  func.func @mymodel_kernel(%arg0: i32, %arg1: memref<128x128xbf16, #tpu.memory_space<vmem>>, %arg2: memref<128x128xbf16, #tpu.memory_space<vmem>>, %arg3: memref<128x1xf32, #tpu.memory_space<vmem>>, %arg4: memref<8x128xbf16, #tpu.memory_space<vmem>>, %arg5: memref<8x128xbf16, #tpu.memory_space<vmem>>, %arg6: memref<1x1xf32, #tpu.memory_space<smem>>, %arg7: memref<1x1x128xf32, #tpu.memory_space<vmem>>) attributes {dimension_semantics = [#tpu.dimension_semantics<parallel>], iteration_bounds = array<i64: 1>, scalar_prefetch = 0 : i64, scratch_operands = 0 : i64, tpu.core_type = #tpu.core_type<tc>, window_params = [{transform_indices = @transform_0, window_bounds = array<i64: 128, 128>}, {pipeline_mode = #tpu.pipeline_mode<synchronous>, transform_indices = @transform_1, window_bounds = array<i64: 128, 128>}, {pipeline_mode = #tpu.pipeline_mode<synchronous>, transform_indices = @transform_2, window_bounds = array<i64: 128, 1>}, {pipeline_mode = #tpu.pipeline_mode<synchronous>, transform_indices = @transform_3, window_bounds = array<i64: 8, 128>}, {pipeline_mode = #tpu.pipeline_mode<synchronous>, transform_indices = @transform_4, window_bounds = array<i64: 8, 128>}, {transform_indices = @transform_5, window_bounds = array<i64: 1, 1>}, {transform_indices = @transform_6, window_bounds = array<i64: 1, 1, 128>}]} {
    %c0 = arith.constant 0 : index
    %c0_0 = arith.constant 0 : index
    %0 = vector.load %arg1[%c0, %c0_0] : memref<128x128xbf16, #tpu.memory_space<vmem>>, vector<128x128xbf16>
    %c0_1 = arith.constant 0 : index
    %c0_2 = arith.constant 0 : index
    %1 = vector.load %arg2[%c0_1, %c0_2] : memref<128x128xbf16, #tpu.memory_space<vmem>>, vector<128x128xbf16>
    %cst = arith.constant dense<0.000000e+00> : vector<128x128xf32>
    %2 = tpu.matmul %1, %0, %cst {dimension_numbers = #tpu.dot_dimension_numbers<[1], [0], [0], [1], [0, 0, 1, 1], [], []>} : vector<128x128xbf16>, vector<128x128xbf16>, vector<128x128xf32> -> vector<128x128xf32>
    %c0_3 = arith.constant 0 : index
    %c0_4 = arith.constant 0 : index
    %3 = vector.load %arg3[%c0_3, %c0_4] : memref<128x1xf32, #tpu.memory_space<vmem>>, vector<128x1xf32>
    %4 = vector.broadcast %3 : vector<128x1xf32> to vector<128x128xf32>
    %5 = arith.addf %2, %4 : vector<128x128xf32>
    %6 = arith.truncf %5 : vector<128x128xf32> to vector<128x128xbf16>
    %7 = arith.mulf %6, %6 : vector<128x128xbf16>
    %c0_5 = arith.constant 0 : index
    %c0_6 = arith.constant 0 : index
    %8 = vector.load %arg4[%c0_5, %c0_6] : memref<8x128xbf16, #tpu.memory_space<vmem>>, vector<8x128xbf16>
    %cst_7 = arith.constant dense<0.000000e+00> : vector<8x128xf32>
    %9 = tpu.matmul %8, %6, %cst_7 {dimension_numbers = #tpu.dot_dimension_numbers<[1], [0], [0], [1], [0, 0, 1, 1], [], []>} : vector<8x128xbf16>, vector<128x128xbf16>, vector<8x128xf32> -> vector<8x128xf32>
    %c0_8 = arith.constant 0 : index
    %c0_9 = arith.constant 0 : index
    %10 = vector.load %arg5[%c0_8, %c0_9] : memref<8x128xbf16, #tpu.memory_space<vmem>>, vector<8x128xbf16>
    %cst_10 = arith.constant dense<0.000000e+00> : vector<8x128xf32>
    %11 = tpu.matmul %10, %7, %cst_10 {dimension_numbers = #tpu.dot_dimension_numbers<[1], [0], [0], [1], [0, 0, 1, 1], [], []>} : vector<8x128xbf16>, vector<128x128xbf16>, vector<8x128xf32> -> vector<8x128xf32>
    %12 = arith.addf %9, %11 : vector<8x128xf32>
    %13 = tpu.iota {dimensions = array<i32: 0>} : vector<8x128xi32>
    %c0_i32 = arith.constant 0 : i32
    %14 = vector.broadcast %c0_i32 : i32 to vector<8x128xi32>
    %15 = arith.cmpi eq, %13, %14 : vector<8x128xi32>
    %cst_11 = arith.constant 5.000000e-01 : f32
    %16 = vector.broadcast %cst_11 : f32 to vector<8x128xf32>
    %17 = arith.mulf %16, %12 : vector<8x128xf32>
    %18 = arith.mulf %17, %12 : vector<8x128xf32>
    %19 = arith.select %15, %12, %18 : vector<8x128xi1>, vector<8x128xf32>
    %cst_12 = arith.constant dense<0.000000e+00> : vector<128xf32>
    %20 = vector.multi_reduction <add>, %19, %cst_12 [0] : vector<8x128xf32> to vector<128xf32>
    %21 = vector.shape_cast %20 : vector<128xf32> to vector<1x128xf32>
    %c0_13 = arith.constant 0 : index
    %c0_14 = arith.constant 0 : index
    %22 = memref.load %arg6[%c0_13, %c0_14] : memref<1x1xf32, #tpu.memory_space<smem>>
    %23 = vector.broadcast %22 : f32 to vector<1x128xf32>
    %24 = arith.addf %21, %23 : vector<1x128xf32>
    %c0_15 = arith.constant 0 : index
    %c0_16 = arith.constant 0 : index
    %c0_17 = arith.constant 0 : index
    %25 = vector.load %arg7[%c0_15, %c0_16, %c0_17] : memref<1x1x128xf32, #tpu.memory_space<vmem>>, vector<1x1x128xf32>
    %26 = vector.shape_cast %25 : vector<1x1x128xf32> to vector<1x128xf32>
    %27 = vector.shape_cast %24 : vector<1x128xf32> to vector<1x1x128xf32>
    tpu.vector_store %arg7[%c0_15, %c0_16, %c0_17], %27 {strides = array<i32>} : memref<1x1x128xf32, #tpu.memory_space<vmem>>, vector<1x1x128xf32>,
    return
  }
  func.func @transform_0(%arg0: i32) -> (i32, i32) {
    %c0_i32 = arith.constant 0 : i32
    %c0_i32_0 = arith.constant 0 : i32
    return %c0_i32, %arg0 : i32, i32
  }
  func.func @transform_1(%arg0: i32) -> (i32, i32) {
    %c0_i32 = arith.constant 0 : i32
    %c0_i32_0 = arith.constant 0 : i32
    %c0_i32_1 = arith.constant 0 : i32
    return %c0_i32, %c0_i32_0 : i32, i32
  }
  func.func @transform_2(%arg0: i32) -> (i32, i32) {
    %c0_i32 = arith.constant 0 : i32
    %c0_i32_0 = arith.constant 0 : i32
    %c0_i32_1 = arith.constant 0 : i32
    return %c0_i32, %c0_i32_0 : i32, i32
  }
  func.func @transform_3(%arg0: i32) -> (i32, i32) {
    %c0_i32 = arith.constant 0 : i32
    %c0_i32_0 = arith.constant 0 : i32
    %c0_i32_1 = arith.constant 0 : i32
    return %c0_i32, %c0_i32_0 : i32, i32
  }
  func.func @transform_4(%arg0: i32) -> (i32, i32) {
    %c0_i32 = arith.constant 0 : i32
    %c0_i32_0 = arith.constant 0 : i32
    %c0_i32_1 = arith.constant 0 : i32
    return %c0_i32, %c0_i32_0 : i32, i32
  }
  func.func @transform_5(%arg0: i32) -> (i32, i32) {
    %c0_i32 = arith.constant 0 : i32
    %c0_i32_0 = arith.constant 0 : i32
    %c0_i32_1 = arith.constant 0 : i32
    return %c0_i32, %c0_i32_0 : i32, i32
  }
  func.func @transform_6(%arg0: i32) -> (i32, i32, i32) {
    %c0_i32 = arith.constant 0 : i32
    %c0_i32_0 = arith.constant 0 : i32
    %c0_i32_1 = arith.constant 0 : i32
    return %arg0, %c0_i32, %c0_i32_0 : i32, i32, i32
  }
}

</mosaic_0001>

<llo_original>
// kernel: mymodel_forward.1
$region0: #{mymodel_forward.1}
  #allocation0 [shape = 'u32[]', space=smem, size = 0x4, offset = 0x4, fixed_abs, tag = 'smem constant byte address 0x4 - core index']
  #allocation1 [shape = 'u32[144,128]{1,0:T(1,128)}', space=vmem, size = 0x12000, scoped, tag = 'internal scratch']
  #allocation2 [shape = 'f32[1,1]{1,0:T(1,128)S(6)}', space=smem, size = 0x200, scoped, tag = 'scoped memory for mymodel_forward.1']
  %s0 = inlined_call_operand.vmem [shape: bf16[128,128], index: 0, kind: input, shape index: {}]
  %s1 = inlined_call_operand.vmem [shape: bf16[128,128], index: 1, kind: input, shape index: {}]
  %s2 = inlined_call_operand.vmem [shape: f32[128,1], index: 2, kind: input, shape index: {}]
  %s3 = inlined_call_operand.vmem [shape: bf16[8,128], index: 3, kind: input, shape index: {}]
  %s4 = inlined_call_operand.vmem [shape: bf16[8,128], index: 4, kind: input, shape index: {}]
  %s5 = inlined_call_operand.<no memory space> [shape: f32[1,1], index: 5, kind: input, shape index: {}]
  %s6 = inlined_call_operand.vmem [shape: f32[1,1,128], index: 6, kind: output, shape index: {}]
  %s7 = sld [smem:[#allocation0]]
  $region34: #{mymodel_forward.1} parent=0
    _
  %s9 = ssub.s32 1, %s7
  %s10 = scalar_select 0, %s9, %s7
  %11 = sst [smem:[#allocation2]] %s5
  // Predicated region
  $region2: #{mymodel_forward.1} parent=0 // pred_check
    _
  $region3: #{mymodel_forward.1} parent=0 // pred_check_branch
    %13 = sbr.rel (0) target = $region5
  $region4: #{mymodel_forward.1} parent=0 // pred_region
    _
  $region5: #{mymodel_forward.1} parent=0 // pred_fallthru
    _
  // Predicated region
  $region6: #{mymodel_forward.1} parent=0 // pred_check
    _
  $region7: #{mymodel_forward.1} parent=0 // pred_check_branch
    %15 = sbr.rel (0) target = $region9
  $region8: #{mymodel_forward.1} parent=0 // pred_region
    _
  $region9: #{mymodel_forward.1} parent=0 // pred_fallthru
    _
  // Predicated region
  $region10: #{mymodel_forward.1} parent=0 // pred_check
    _
  $region11: #{mymodel_forward.1} parent=0 // pred_check_branch
    %17 = sbr.rel (0) target = $region13
  $region12: #{mymodel_forward.1} parent=0 // pred_region
    _
  $region13: #{mymodel_forward.1} parent=0 // pred_fallthru
    _
  // Predicated region
  $region14: #{mymodel_forward.1} parent=0 // pred_check
    _
  $region15: #{mymodel_forward.1} parent=0 // pred_check_branch
    %19 = sbr.rel (0) target = $region17
  $region16: #{mymodel_forward.1} parent=0 // pred_region
    _
  $region17: #{mymodel_forward.1} parent=0 // pred_fallthru
    _
  // Predicated region
  $region18: #{mymodel_forward.1} parent=0 // pred_check
    _
  $region19: #{mymodel_forward.1} parent=0 // pred_check_branch
    %21 = sbr.rel (0) target = $region21
  $region20: #{mymodel_forward.1} parent=0 // pred_region
    _
  $region21: #{mymodel_forward.1} parent=0 // pred_fallthru
    _
  // Predicated region
  $region22: #{mymodel_forward.1} parent=0 // pred_check
    _
  $region23: #{mymodel_forward.1} parent=0 // pred_check_branch
    %23 = sbr.rel (0) target = $region25
  $region24: #{mymodel_forward.1} parent=0 // pred_region
    _
  $region25: #{mymodel_forward.1} parent=0 // pred_fallthru
    _
  %v25 = vld [vmem:[%s0] sm:$0xf]
  %v26 = vld [vmem:[%s0 + $0x4] sm:$0xf]
  %v27 = vld [vmem:[%s0 + $0x8] sm:$0xf]
  %v28 = vld [vmem:[%s0 + $0xc] sm:$0xf]
  %v29 = vld [vmem:[%s0 + $0x10] sm:$0xf]
  %v30 = vld [vmem:[%s0 + $0x14] sm:$0xf]
  %v31 = vld [vmem:[%s0 + $0x18] sm:$0xf]
  %v32 = vld [vmem:[%s0 + $0x1c] sm:$0xf]
  %v33 = vld [vmem:[%s0 + $0x20] sm:$0xf]
  %v34 = vld [vmem:[%s0 + $0x24] sm:$0xf]
  %v35 = vld [vmem:[%s0 + $0x28] sm:$0xf]
  %v36 = vld [vmem:[%s0 + $0x2c] sm:$0xf]
  %v37 = vld [vmem:[%s0 + $0x30] sm:$0xf]
  %v38 = vld [vmem:[%s0 + $0x34] sm:$0xf]
  %v39 = vld [vmem:[%s0 + $0x38] sm:$0xf]
  %v40 = vld [vmem:[%s0 + $0x3c] sm:$0xf]
  %v41 = vld [vmem:[%s1] sm:$0xf]
  %v42 = vld [vmem:[%s1 + $0x4] sm:$0xf]
  %v43 = vld [vmem:[%s1 + $0x8] sm:$0xf]
  %v44 = vld [vmem:[%s1 + $0xc] sm:$0xf]
  %v45 = vld [vmem:[%s1 + $0x10] sm:$0xf]
  %v46 = vld [vmem:[%s1 + $0x14] sm:$0xf]
  %v47 = vld [vmem:[%s1 + $0x18] sm:$0xf]
  %v48 = vld [vmem:[%s1 + $0x1c] sm:$0xf]
  %v49 = vld [vmem:[%s1 + $0x20] sm:$0xf]
  %v50 = vld [vmem:[%s1 + $0x24] sm:$0xf]
  %v51 = vld [vmem:[%s1 + $0x28] sm:$0xf]
  %v52 = vld [vmem:[%s1 + $0x2c] sm:$0xf]
  %v53 = vld [vmem:[%s1 + $0x30] sm:$0xf]
  %v54 = vld [vmem:[%s1 + $0x34] sm:$0xf]
  %v55 = vld [vmem:[%s1 + $0x38] sm:$0xf]
  %v56 = vld [vmem:[%s1 + $0x3c] sm:$0xf]
  %v57 = vld [vmem:[%s2] sm:$0xff]
  %v58 = vld [vmem:[%s2 + $0x8] sm:$0xff]
  %v59 = vld [vmem:[%s2 + $0x10] sm:$0xff]
  %v60 = vld [vmem:[%s2 + $0x18] sm:$0xff]
  %v61 = vld [vmem:[%s2 + $0x20] sm:$0xff]
  %v62 = vld [vmem:[%s2 + $0x28] sm:$0xff]
  %v63 = vld [vmem:[%s2 + $0x30] sm:$0xff]
  %v64 = vld [vmem:[%s2 + $0x38] sm:$0xff]
  %v65 = vld [vmem:[%s2 + $0x40] sm:$0xff]
  %v66 = vld [vmem:[%s2 + $0x48] sm:$0xff]
  %v67 = vld [vmem:[%s2 + $0x50] sm:$0xff]
  %v68 = vld [vmem:[%s2 + $0x58] sm:$0xff]
  %v69 = vld [vmem:[%s2 + $0x60] sm:$0xff]
  %v70 = vld [vmem:[%s2 + $0x68] sm:$0xff]
  %v71 = vld [vmem:[%s2 + $0x70] sm:$0xff]
  %v72 = vld [vmem:[%s2 + $0x78] sm:$0xff]
  %74 = vset.pattern.permute.xlu0 0
  %75 = vperm.xlu0 %74, %v57
  %v76 = vpop.permute.xlu0 %75
  %79 = vset.pattern.permute.xlu0 0
  %80 = vperm.xlu0 %79, %v58
  %v81 = vpop.permute.xlu0 %80
  %84 = vset.pattern.permute.xlu0 0
  %85 = vperm.xlu0 %84, %v59
  %v86 = vpop.permute.xlu0 %85
  %89 = vset.pattern.permute.xlu0 0
  %90 = vperm.xlu0 %89, %v60
  %v91 = vpop.permute.xlu0 %90
  %94 = vset.pattern.permute.xlu0 0
  %95 = vperm.xlu0 %94, %v61
  %v96 = vpop.permute.xlu0 %95
  %99 = vset.pattern.permute.xlu0 0
  %100 = vperm.xlu0 %99, %v62
  %v101 = vpop.permute.xlu0 %100
  %104 = vset.pattern.permute.xlu0 0
  %105 = vperm.xlu0 %104, %v63
  %v106 = vpop.permute.xlu0 %105
  %109 = vset.pattern.permute.xlu0 0
  %110 = vperm.xlu0 %109, %v64
  %v111 = vpop.permute.xlu0 %110
  %114 = vset.pattern.permute.xlu0 0
  %115 = vperm.xlu0 %114, %v65
  %v116 = vpop.permute.xlu0 %115
  %119 = vset.pattern.permute.xlu0 0
  %120 = vperm.xlu0 %119, %v66
  %v121 = vpop.permute.xlu0 %120
  %124 = vset.pattern.permute.xlu0 0
  %125 = vperm.xlu0 %124, %v67
  %v126 = vpop.permute.xlu0 %125
  %129 = vset.pattern.permute.xlu0 0
  %130 = vperm.xlu0 %129, %v68
  %v131 = vpop.permute.xlu0 %130
  %134 = vset.pattern.permute.xlu0 0
  %135 = vperm.xlu0 %134, %v69
  %v136 = vpop.permute.xlu0 %135
  %139 = vset.pattern.permute.xlu0 0
  %140 = vperm.xlu0 %139, %v70
  %v141 = vpop.permute.xlu0 %140
  %144 = vset.pattern.permute.xlu0 0
  %145 = vperm.xlu0 %144, %v71
  %v146 = vpop.permute.xlu0 %145
  %149 = vset.pattern.permute.xlu0 0
  %150 = vperm.xlu0 %149, %v72
  %v151 = vpop.permute.xlu0 %150
  %v169 = vunpack.c.l.b16 %v41
  %v170 = vunpack.c.l.b16 %v42
  %v171 = vunpack.c.l.b16 %v43
  %v172 = vunpack.c.l.b16 %v44
  %v173 = vunpack.c.l.b16 %v45
  %v174 = vunpack.c.l.b16 %v46
  %v175 = vunpack.c.l.b16 %v47
  %v176 = vunpack.c.l.b16 %v48
  %v177 = vunpack.c.l.b16 %v49
  %v178 = vunpack.c.l.b16 %v50
  %v179 = vunpack.c.l.b16 %v51
  %v180 = vunpack.c.l.b16 %v52
  %v181 = vunpack.c.l.b16 %v53
  %v182 = vunpack.c.l.b16 %v54
  %v183 = vunpack.c.l.b16 %v55
  %v184 = vunpack.c.l.b16 %v56
  %v185 = vpack.c.b16 %v170, %v169
  %v186 = vpack.c.b16 %v172, %v171
  %v187 = vpack.c.b16 %v174, %v173
  %v188 = vpack.c.b16 %v176, %v175
  %v189 = vpack.c.b16 %v178, %v177
  %v190 = vpack.c.b16 %v180, %v179
  %v191 = vpack.c.b16 %v182, %v181
  %v192 = vpack.c.b16 %v184, %v183
  %v217 = vunpack.c.l.b16 %v25
  %v218 = vunpack.c.l.b16 %v26
  %v219 = vunpack.c.l.b16 %v27
  %v220 = vunpack.c.l.b16 %v28
  %v221 = vunpack.c.l.b16 %v29
  %v222 = vunpack.c.l.b16 %v30
  %v223 = vunpack.c.l.b16 %v31
  %v224 = vunpack.c.l.b16 %v32
  %v225 = vunpack.c.l.b16 %v33
  %v226 = vunpack.c.l.b16 %v34
  %v227 = vunpack.c.l.b16 %v35
  %v228 = vunpack.c.l.b16 %v36
  %v229 = vunpack.c.l.b16 %v37
  %v230 = vunpack.c.l.b16 %v38
  %v231 = vunpack.c.l.b16 %v39
  %v232 = vunpack.c.l.b16 %v40
  %v233 = vpack.c.b16 %v218, %v217
  %v234 = vpack.c.b16 %v220, %v219
  %v235 = vpack.c.b16 %v222, %v221
  %v236 = vpack.c.b16 %v224, %v223
  %v237 = vpack.c.b16 %v226, %v225
  %v238 = vpack.c.b16 %v228, %v227
  %v239 = vpack.c.b16 %v230, %v229
  %v240 = vpack.c.b16 %v232, %v231
  %249 = vmatprep.subr.bf16.mxu0 0
  %250 = vmatpush1.bf16.msra.mxu0 %v240
  %251 = vmatprep.subr.bf16.mxu0 0
  %252 = vmatpush1.bf16.msra.mxu0 %v239
  %253 = vmatprep.subr.bf16.mxu0 0
  %254 = vmatpush1.bf16.msra.mxu0 %v238
  %255 = vmatprep.subr.bf16.mxu0 0
  %256 = vmatpush1.bf16.msra.mxu0 %v237
  %257 = vmatprep.subr.bf16.mxu0 0
  %258 = vmatpush1.bf16.msra.mxu0 %v236
  %259 = vmatprep.subr.bf16.mxu0 0
  %260 = vmatpush1.bf16.msra.mxu0 %v235
  %261 = vmatprep.subr.bf16.mxu0 0
  %262 = vmatpush1.bf16.msra.mxu0 %v234
  %263 = vmatprep.subr.bf16.mxu0 0
  %264 = vmatpush1.bf16.msra.mxu0 %v233
  %265 = vmatprep.subr.bf16.mxu0 0
  %266 = vmatpush2.bf16.msra.mxu0 0
  %267 = vmatprep.subr.bf16.mxu0 0
  %268 = vmatpush2.bf16.msra.mxu0 0
  %269 = vmatprep.subr.bf16.mxu0 0
  %270 = vmatpush2.bf16.msra.mxu0 0
  %271 = vmatprep.subr.bf16.mxu0 0
  %272 = vmatpush2.bf16.msra.mxu0 0
  %273 = vmatprep.subr.bf16.mxu0 0
  %274 = vmatpush2.bf16.msra.mxu0 0
  %275 = vmatprep.subr.bf16.mxu0 0
  %276 = vmatpush2.bf16.msra.mxu0 0
  %277 = vmatprep.subr.bf16.mxu0 0
  %278 = vmatpush2.bf16.msra.mxu0 0
  %279 = vmatprep.subr.bf16.mxu0 0
  %280 = vmatpush2.bf16.msra.mxu0 0
  %281 = vmatprep.mubr.bf16.mxu0 0
  %282 = vmatmul.mubr.bf16.gmra.mxu0 %v185
  %v283 = vpop.f32.mrf.mxu0
  %v284 = vadd.f32 %v76, %v283
  %v285 = vpop.f32.mrf.mxu0
  %v286 = vpop.f32.mrf.mxu0
  %v287 = vadd.f32 %v81, %v286
  %v288 = vpop.f32.mrf.mxu0
  %289 = vmatprep.mubr.bf16.mxu0 0
  %290 = vmatmul.mubr.bf16.gmra.mxu0 %v186
  %v291 = vpop.f32.mrf.mxu0
  %v292 = vadd.f32 %v86, %v291
  %v293 = vpop.f32.mrf.mxu0
  %v294 = vpop.f32.mrf.mxu0
  %v295 = vadd.f32 %v91, %v294
  %v296 = vpop.f32.mrf.mxu0
  %297 = vmatprep.mubr.bf16.mxu0 0
  %298 = vmatmul.mubr.bf16.gmra.mxu0 %v187
  %v299 = vpop.f32.mrf.mxu0
  %v300 = vadd.f32 %v96, %v299
  %v301 = vpop.f32.mrf.mxu0
  %v302 = vpop.f32.mrf.mxu0
  %v303 = vadd.f32 %v101, %v302
  %v304 = vpop.f32.mrf.mxu0
  %305 = vmatprep.mubr.bf16.mxu0 0
  %306 = vmatmul.mubr.bf16.gmra.mxu0 %v188
  %v307 = vpop.f32.mrf.mxu0
  %v308 = vadd.f32 %v106, %v307
  %v309 = vpop.f32.mrf.mxu0
  %v310 = vpop.f32.mrf.mxu0
  %v311 = vadd.f32 %v111, %v310
  %v312 = vpop.f32.mrf.mxu0
  %313 = vmatprep.mubr.bf16.mxu0 0
  %314 = vmatmul.mubr.bf16.gmra.mxu0 %v189
  %v315 = vpop.f32.mrf.mxu0
  %v316 = vadd.f32 %v116, %v315
  %v317 = vpop.f32.mrf.mxu0
  %v318 = vpop.f32.mrf.mxu0
  %v319 = vadd.f32 %v121, %v318
  %v320 = vpop.f32.mrf.mxu0
  %321 = vmatprep.mubr.bf16.mxu0 0
  %322 = vmatmul.mubr.bf16.gmra.mxu0 %v190
  %v323 = vpop.f32.mrf.mxu0
  %v324 = vadd.f32 %v126, %v323
  %v325 = vpop.f32.mrf.mxu0
  %v326 = vpop.f32.mrf.mxu0
  %v327 = vadd.f32 %v131, %v326
  %v328 = vpop.f32.mrf.mxu0
  %329 = vmatprep.mubr.bf16.mxu0 0
  %330 = vmatmul.mubr.bf16.gmra.mxu0 %v191
  %v331 = vpop.f32.mrf.mxu0
  %v332 = vadd.f32 %v136, %v331
  %v333 = vpop.f32.mrf.mxu0
  %v334 = vpop.f32.mrf.mxu0
  %v335 = vadd.f32 %v141, %v334
  %v336 = vpop.f32.mrf.mxu0
  %337 = vmatprep.mubr.bf16.mxu0 0
  %338 = vmatmul.mubr.bf16.gmra.mxu0 %v192
  %v339 = vpop.f32.mrf.mxu0
  %v340 = vadd.f32 %v146, %v339
  %v341 = vpop.f32.mrf.mxu0
  %v342 = vpop.f32.mrf.mxu0
  %v343 = vadd.f32 %v151, %v342
  %v344 = vpop.f32.mrf.mxu0
  %345 = vdwg.mxu0
  %v346 = vpack.c.bf16 %v287, %v284
  %v347 = vpack.c.bf16 %v295, %v292
  %v348 = vpack.c.bf16 %v303, %v300
  %v349 = vpack.c.bf16 %v311, %v308
  %v350 = vpack.c.bf16 %v319, %v316
  %v351 = vpack.c.bf16 %v327, %v324
  %v352 = vpack.c.bf16 %v335, %v332
  %v353 = vpack.c.bf16 %v343, %v340
  %v354 = vmul.bf16 %v346, %v346
  %v355 = vmul.bf16 %v347, %v347
  %v356 = vmul.bf16 %v348, %v348
  %v357 = vmul.bf16 %v349, %v349
  %v358 = vmul.bf16 %v350, %v350
  %v359 = vmul.bf16 %v351, %v351
  %v360 = vmul.bf16 %v352, %v352
  %v361 = vmul.bf16 %v353, %v353
  %v362 = vld [vmem:[%s3] sm:$0xf]
  %v363 = vld [vmem:[%s4] sm:$0xf]
  %364 = vmatprep.subr.bf16.mxu0 0
  %365 = vmatpush1.bf16.msra.mxu0 %v361
  %366 = vmatprep.subr.bf16.mxu0 0
  %367 = vmatpush1.bf16.msra.mxu0 %v360
  %368 = vmatprep.subr.bf16.mxu0 0
  %369 = vmatpush1.bf16.msra.mxu0 %v359
  %370 = vmatprep.subr.bf16.mxu0 0
  %371 = vmatpush1.bf16.msra.mxu0 %v358
  %372 = vmatprep.subr.bf16.mxu0 0
  %373 = vmatpush1.bf16.msra.mxu0 %v357
  %374 = vmatprep.subr.bf16.mxu0 0
  %375 = vmatpush1.bf16.msra.mxu0 %v356
  %376 = vmatprep.subr.bf16.mxu0 0
  %377 = vmatpush1.bf16.msra.mxu0 %v355
  %378 = vmatprep.subr.bf16.mxu0 0
  %379 = vmatpush1.bf16.msra.mxu0 %v354
  %380 = vmatprep.subr.bf16.mxu0 0
  %381 = vmatpush2.bf16.msra.mxu0 0
  %382 = vmatprep.subr.bf16.mxu0 0
  %383 = vmatpush2.bf16.msra.mxu0 0
  %384 = vmatprep.subr.bf16.mxu0 0
  %385 = vmatpush2.bf16.msra.mxu0 0
  %386 = vmatprep.subr.bf16.mxu0 0
  %387 = vmatpush2.bf16.msra.mxu0 0
  %388 = vmatprep.subr.bf16.mxu0 0
  %389 = vmatpush2.bf16.msra.mxu0 0
  %390 = vmatprep.subr.bf16.mxu0 0
  %391 = vmatpush2.bf16.msra.mxu0 0
  %392 = vmatprep.subr.bf16.mxu0 0
  %393 = vmatpush2.bf16.msra.mxu0 0
  %394 = vmatprep.subr.bf16.mxu0 0
  %395 = vmatpush2.bf16.msra.mxu0 0
  %396 = vmatprep.mubr.bf16.mxu0 0
  %397 = vmatmul.mubr.bf16.gmra.mxu0 %v363
  %v398 = vpop.f32.mrf.mxu0
  %v399 = vadd.f32 0.0, %v398
  %v400 = vpop.f32.mrf.mxu0
  %v401 = vpop.f32.mrf.mxu0
  %v402 = vpop.f32.mrf.mxu0
  %403 = vdwg.mxu0
  %404 = vmatprep.subr.bf16.mxu0 0
  %405 = vmatpush1.bf16.msra.mxu0 %v353
  %406 = vmatprep.subr.bf16.mxu0 0
  %407 = vmatpush1.bf16.msra.mxu0 %v352
  %408 = vmatprep.subr.bf16.mxu0 0
  %409 = vmatpush1.bf16.msra.mxu0 %v351
  %410 = vmatprep.subr.bf16.mxu0 0
  %411 = vmatpush1.bf16.msra.mxu0 %v350
  %412 = vmatprep.subr.bf16.mxu0 0
  %413 = vmatpush1.bf16.msra.mxu0 %v349
  %414 = vmatprep.subr.bf16.mxu0 0
  %415 = vmatpush1.bf16.msra.mxu0 %v348
  %416 = vmatprep.subr.bf16.mxu0 0
  %417 = vmatpush1.bf16.msra.mxu0 %v347
  %418 = vmatprep.subr.bf16.mxu0 0
  %419 = vmatpush1.bf16.msra.mxu0 %v346
  %420 = vmatprep.subr.bf16.mxu0 0
  %421 = vmatpush2.bf16.msra.mxu0 0
  %422 = vmatprep.subr.bf16.mxu0 0
  %423 = vmatpush2.bf16.msra.mxu0 0
  %424 = vmatprep.subr.bf16.mxu0 0
  %425 = vmatpush2.bf16.msra.mxu0 0
  %426 = vmatprep.subr.bf16.mxu0 0
  %427 = vmatpush2.bf16.msra.mxu0 0
  %428 = vmatprep.subr.bf16.mxu0 0
  %429 = vmatpush2.bf16.msra.mxu0 0
  %430 = vmatprep.subr.bf16.mxu0 0
  %431 = vmatpush2.bf16.msra.mxu0 0
  %432 = vmatprep.subr.bf16.mxu0 0
  %433 = vmatpush2.bf16.msra.mxu0 0
  %434 = vmatprep.subr.bf16.mxu0 0
  %435 = vmatpush2.bf16.msra.mxu0 0
  %436 = vmatprep.mubr.bf16.mxu0 0
  %437 = vmatmul.mubr.bf16.gmra.mxu0 %v362
  %v438 = vpop.f32.mrf.mxu0
  %v439 = vadd.f32 %v399, %v438
  %v440 = vpop.f32.mrf.mxu0
  %v441 = vpop.f32.mrf.mxu0
  %v442 = vpop.f32.mrf.mxu0
  %443 = vdwg.mxu0
  %v444 = vlaneseq
  %v445 = vshrl.u32 %v444, 7
  %vm446 = vcmp.eq.s32.totalorder %v445, 0
  %v447 = vmul.f32 %v439, 0.5
  %v448 = vmul.f32 %v447, %v439
  %v449 = vsel %vm446, %v439, %v448
  %v450 = vrot.slane %v449, 4
  %v451 = vadd.f32 %v449, %v450
  %v452 = vrot.slane %v451, 2
  %v453 = vadd.f32 %v451, %v452
  %v454 = vrot.slane %v453, 1
  %v455 = vadd.f32 %v453, %v454
  %s456 = sld [smem:[#allocation2]]
  %v457 = vstv %s456
  %v458 = vadd.f32 %v455, %v457
  %459 = vst [vmem:[%s6] sm:$0x1] %v458
  // Predicated region
  $region26: #{mymodel_forward.1} parent=0 // pred_check
    _
  $region27: #{mymodel_forward.1} parent=0 // pred_check_branch
    %461 = sbr.rel (0) target = $region29
  $region28: #{mymodel_forward.1} parent=0 // pred_region
    _
  $region29: #{mymodel_forward.1} parent=0 // pred_fallthru
    _
  // Predicated region
  $region30: #{mymodel_forward.1} parent=0 // pred_check
    _
  $region31: #{mymodel_forward.1} parent=0 // pred_check_branch
    %463 = sbr.rel (0) target = $region33
  $region32: #{mymodel_forward.1} parent=0 // pred_region
    _
  $region33: #{mymodel_forward.1} parent=0 // pred_fallthru
    _

</llo_original>
